<compile_context>
chip_gen: v7x
topology: tpu7x:2x2x1
jax: 0.10.0
libtpu: 0.0.40
codegen_flags: <defaults>
</compile_context>

<pallas_src>
from functools import partial

import numpy as np
import jax
import jax.numpy as jnp
from jax.experimental import pallas as pl
from jax.experimental.pallas import tpu as pltpu


def _loss_kernel(lam_ref, mask_ref, p_ref, netp_ref, v_ref, netv_ref,
                 out_ref, *, H, W):
    """One batch-block: emit the pre-weighted partial loss for this block."""
    f32 = jnp.float32
    L = 2 * H * W

    lam_p = lam_ref[0]
    lam_v = lam_ref[1]
    lam_d = lam_ref[2]

    # ---- pressure MSE (sum) ----
    dp = netp_ref[...].astype(f32) - p_ref[...].astype(f32)
    p_sum = jnp.sum(dp * dp)

    # ---- velocity planes: channels interleaved on the lane axis ----
    vel_t = v_ref[...].astype(f32)        # (bb, 2*H*W), lane f = (h*W+w)*2 + c
    vel_n = netv_ref[...].astype(f32)
    dvel = vel_n - vel_t                  # channel order irrelevant for the MSE

    # ---- divergence of the predicted velocity on the interior ----
    # At the u-lane f = (h*W+w)*2:
    #   u[h, w+1] = vel[f+2]       -> roll by -2
    #   v[h,   w] = vel[f+1]       -> roll by -1
    #   v[h+1, w] = vel[f+2W+1]    -> roll by -(2W+1)
    # Roll wrap-around only lands on lanes with w == W-1, h == H-1 or c == 1,
    # all of which the precomputed interior mask zeroes, so no halo handling
    # is needed.
    vel_p2 = pltpu.roll(vel_n, (L - 2) % L, 1)
    vel_p1 = pltpu.roll(vel_n, (L - 1) % L, 1)
    vel_pv = pltpu.roll(vel_n, (L - 2 * W - 1) % L, 1)
    div = mask_ref[...] * ((vel_p2 - vel_n) + (vel_pv - vel_p1))

    # ---- fused, pre-weighted partial sum for this batch block ----
    plane = lam_v * (dvel * dvel) + lam_d * (div * div)
    out_ref[0, 0] = lam_p * p_sum + jnp.sum(plane)


def _tpu_vmem_capacity():
    try:
        return int(pltpu.get_tpu_info().vmem_capacity_bytes)
    except Exception:
        return None


def _pick_batch_block(B, HW, itemsize, budget, prefer_split):
    """Largest sublane-legal batch tile whose VMEM footprint stays safe."""
    # per batch row: 6 input planes x 2 pipeline buffers + ~12 f32 temporaries
    per_b = 2 * 6 * HW * itemsize + 12 * (2 * HW) * 4
    cap = int(max(1, budget // per_b))
    if prefer_split and B >= 16:
        # keep >= 2 grid steps so both v7x TensorCores get work
        half8 = ((-(-B // 2)) + 7) // 8 * 8
        cap = min(cap, max(8, half8))
    if B <= cap:
        return B                       # full-dim block is always layout-legal
    mult8 = [d for d in range(8, cap + 1, 8) if B % d == 0]
    if mult8:                          # keep sublane tiling (8) aligned
        return max(mult8)
    return B                           # never emit a non-mult-of-8 partial block


def loss_func(lamda_p, lamda_v, lamda_div, th_p, th_v, th_netp, th_netv):
    """JAX/Pallas equivalent of LossFunc.forward (returns a scalar f32)."""
    B, H, W = th_p.shape
    HW = H * W
    L = 2 * HW

    # Lane-dense planes via pure reshapes only (no wrapper transposes).
    p2 = th_p.reshape(B, HW)
    netp2 = th_netp.reshape(B, HW)
    v2 = th_v.reshape(B, L)            # channels interleaved on the lane axis
    netv2 = th_netv.reshape(B, L)

    lam = jnp.asarray([lamda_p, lamda_v, lamda_div], dtype=jnp.float32)

    # Constant interior mask on the u-lanes, hoisted out of the kernel.
    hh = np.arange(H)[:, None]
    ww = np.arange(W)[None, :]
    interior = (hh >= 1) & (hh <= H - 2) & (ww >= 1) & (ww <= W - 2)
    mask_np = np.zeros((H, W, 2), np.float32)
    mask_np[..., 0] = interior.astype(np.float32)
    mask = jnp.asarray(mask_np.reshape(1, L))

    itemsize = max(jnp.dtype(a.dtype).itemsize
                   for a in (p2, netp2, v2, netv2))
    vmem_cap = _tpu_vmem_capacity()
    big_vmem = vmem_cap is not None and vmem_cap > 96 * 1024 * 1024
    budget = (40 if big_vmem else 12) * 1024 * 1024   # v5e/v6e vs v7x/unknown
    bb = _pick_batch_block(B, HW, itemsize, budget, prefer_split=not big_vmem)
    nb = B // bb

    tile_bytes = 6 * bb * HW * itemsize               # one set of input tiles
    temp_bytes = 12 * bb * L * 4                      # in-kernel f32 temporaries
    ceiling = (100 if big_vmem else 48) * 1024 * 1024
    vmem_limit = int(min(ceiling,
                         max(16 * 1024 * 1024,
                             2 * tile_bytes + temp_bytes + (2 << 20))))

    smem_out = pl.BlockSpec((1, 1), lambda i: (i, 0),
                            memory_space=pltpu.MemorySpace.SMEM)

    parts = pl.pallas_call(
        partial(_loss_kernel, H=H, W=W),
        grid=(nb,),
        in_specs=[
            pl.BlockSpec(memory_space=pltpu.MemorySpace.SMEM),   # lamdas
            pl.BlockSpec((1, L), lambda i: (0, 0)),              # interior mask
            pl.BlockSpec((bb, HW), lambda i: (i, 0)),            # th_p
            pl.BlockSpec((bb, HW), lambda i: (i, 0)),            # th_netp
            pl.BlockSpec((bb, L), lambda i: (i, 0)),             # th_v
            pl.BlockSpec((bb, L), lambda i: (i, 0)),             # th_netv
        ],
        out_specs=smem_out,
        out_shape=jax.ShapeDtypeStruct((nb, 1), jnp.float32),
        compiler_params=pltpu.CompilerParams(
            dimension_semantics=("parallel",),
            vmem_limit_bytes=vmem_limit),
    )(lam, mask, p2, netp2, v2, netv2)

    return jnp.sum(parts)


def _loss_ref(lamda_p, lamda_v, lamda_div, th_p, th_v, th_netp, th_netv):
    """Pure-JAX reference mirroring the PyTorch module."""
    u = th_netv[..., 0]
    v = th_netv[..., 1]
    div = jnp.zeros_like(u)
    div = div.at[:, 1:-1, 1:-1].set(
        u[:, 1:-1, 2:] - u[:, 1:-1, 1:-1] + v[:, 2:, 1:-1] - v[:, 1:-1, 1:-1])
    p_loss = jnp.sum((th_netp - th_p) ** 2)
    v_loss = jnp.sum((th_netv - th_v) ** 2)
    d_loss = jnp.sum(div ** 2)
    return lamda_p * p_loss + lamda_v * v_loss + lamda_div * d_loss


if __name__ == "__main__":
    B, H, W = 2, 16, 16
    key = jax.random.PRNGKey(0)
    k1, k2, k3, k4 = jax.random.split(key, 4)

    th_p = jax.random.normal(k1, (B, H, W), dtype=jnp.float32)
    th_v = jax.random.normal(k2, (B, H, W, 2), dtype=jnp.float32)
    th_netp = jax.random.normal(k3, (B, H, W), dtype=jnp.float32)
    th_netv = jax.random.normal(k4, (B, H, W, 2), dtype=jnp.float32)

    lamda_p, lamda_v, lamda_div = 0.5, 1.0, 0.25

    out = loss_func(lamda_p, lamda_v, lamda_div, th_p, th_v, th_netp, th_netv)
    out = jax.block_until_ready(out)

    ref = _loss_ref(lamda_p, lamda_v, lamda_div, th_p, th_v, th_netp, th_netv)
    assert jnp.allclose(out, ref, rtol=1e-5, atol=1e-4), (out, ref)

    print("KERNEL_OK")
</pallas_src>

<mosaic_0001>
module attributes {stable_mosaic.version = 11 : i64} {
  func.func @_loss_kernel(%arg0: i32, %arg1: memref<3xf32, #tpu.memory_space<smem>>, %arg2: memref<1x512xf32, #tpu.memory_space<vmem>>, %arg3: memref<2x256xf32, #tpu.memory_space<vmem>>, %arg4: memref<2x256xf32, #tpu.memory_space<vmem>>, %arg5: memref<2x512xf32, #tpu.memory_space<vmem>>, %arg6: memref<2x512xf32, #tpu.memory_space<vmem>>, %arg7: memref<1x1xf32, #tpu.memory_space<smem>>) attributes {dimension_semantics = [#tpu.dimension_semantics<parallel>], iteration_bounds = array<i64: 1>, scalar_prefetch = 0 : i64, scratch_operands = 0 : i64, tpu.core_type = #tpu.core_type<tc>, window_params = [{transform_indices = @transform_0, window_bounds = array<i64: 3>}, {pipeline_mode = #tpu.pipeline_mode<synchronous>, transform_indices = @transform_1, window_bounds = array<i64: 1, 512>}, {transform_indices = @transform_2, window_bounds = array<i64: 2, 256>}, {transform_indices = @transform_3, window_bounds = array<i64: 2, 256>}, {transform_indices = @transform_4, window_bounds = array<i64: 2, 512>}, {transform_indices = @transform_5, window_bounds = array<i64: 2, 512>}, {transform_indices = @transform_6, window_bounds = array<i64: 1, 1>}]} {
    %c0 = arith.constant 0 : index
    %0 = memref.load %arg1[%c0] : memref<3xf32, #tpu.memory_space<smem>>
    %c1 = arith.constant 1 : index
    %1 = memref.load %arg1[%c1] : memref<3xf32, #tpu.memory_space<smem>>
    %c2 = arith.constant 2 : index
    %2 = memref.load %arg1[%c2] : memref<3xf32, #tpu.memory_space<smem>>
    %c0_0 = arith.constant 0 : index
    %c0_1 = arith.constant 0 : index
    %3 = vector.load %arg4[%c0_0, %c0_1] : memref<2x256xf32, #tpu.memory_space<vmem>>, vector<2x256xf32>
    %c0_2 = arith.constant 0 : index
    %c0_3 = arith.constant 0 : index
    %4 = vector.load %arg3[%c0_2, %c0_3] : memref<2x256xf32, #tpu.memory_space<vmem>>, vector<2x256xf32>
    %5 = arith.subf %3, %4 : vector<2x256xf32>
    %6 = arith.mulf %5, %5 : vector<2x256xf32>
    %7 = vector.shape_cast %6 : vector<2x256xf32> to vector<1x2x256xf32>
    %cst = arith.constant dense<0.000000e+00> : vector<1xf32>
    %8 = vector.multi_reduction <add>, %7, %cst [1, 2] : vector<1x2x256xf32> to vector<1xf32>
    %9 = vector.shape_cast %8 : vector<1xf32> to vector<1x1x1xf32>
    %10 = vector.extract %9[0, 0, 0] : f32 from vector<1x1x1xf32>
    %c0_4 = arith.constant 0 : index
    %c0_5 = arith.constant 0 : index
    %11 = vector.load %arg5[%c0_4, %c0_5] : memref<2x512xf32, #tpu.memory_space<vmem>>, vector<2x512xf32>
    %c0_6 = arith.constant 0 : index
    %c0_7 = arith.constant 0 : index
    %12 = vector.load %arg6[%c0_6, %c0_7] : memref<2x512xf32, #tpu.memory_space<vmem>>, vector<2x512xf32>
    %13 = arith.subf %12, %11 : vector<2x512xf32>
    %c510_i32 = arith.constant 510 : i32
    %14 = tpu.dynamic_rotate %12 by %c510_i32 dim 1 : vector<2x512xf32>, i32 -> vector<2x512xf32>
    %c511_i32 = arith.constant 511 : i32
    %15 = tpu.dynamic_rotate %12 by %c511_i32 dim 1 : vector<2x512xf32>, i32 -> vector<2x512xf32>
    %c479_i32 = arith.constant 479 : i32
    %16 = tpu.dynamic_rotate %12 by %c479_i32 dim 1 : vector<2x512xf32>, i32 -> vector<2x512xf32>
    %c0_8 = arith.constant 0 : index
    %c0_9 = arith.constant 0 : index
    %17 = vector.load %arg2[%c0_8, %c0_9] : memref<1x512xf32, #tpu.memory_space<vmem>>, vector<1x512xf32>
    %18 = arith.subf %14, %12 : vector<2x512xf32>
    %19 = arith.subf %16, %15 : vector<2x512xf32>
    %20 = arith.addf %18, %19 : vector<2x512xf32>
    %21 = vector.broadcast %17 : vector<1x512xf32> to vector<2x512xf32>
    %22 = arith.mulf %21, %20 : vector<2x512xf32>
    %23 = arith.mulf %13, %13 : vector<2x512xf32>
    %24 = vector.broadcast %1 : f32 to vector<2x512xf32>
    %25 = arith.mulf %24, %23 : vector<2x512xf32>
    %26 = arith.mulf %22, %22 : vector<2x512xf32>
    %27 = vector.broadcast %2 : f32 to vector<2x512xf32>
    %28 = arith.mulf %27, %26 : vector<2x512xf32>
    %29 = arith.addf %25, %28 : vector<2x512xf32>
    %30 = arith.mulf %0, %10 : f32
    %31 = vector.shape_cast %29 : vector<2x512xf32> to vector<1x2x512xf32>
    %cst_10 = arith.constant dense<0.000000e+00> : vector<1xf32>
    %32 = vector.multi_reduction <add>, %31, %cst_10 [1, 2] : vector<1x2x512xf32> to vector<1xf32>
    %33 = vector.shape_cast %32 : vector<1xf32> to vector<1x1x1xf32>
    %34 = vector.extract %33[0, 0, 0] : f32 from vector<1x1x1xf32>
    %35 = arith.addf %30, %34 : f32
    %c0_11 = arith.constant 0 : index
    %c0_12 = arith.constant 0 : index
    %36 = memref.load %arg7[%c0_11, %c0_12] : memref<1x1xf32, #tpu.memory_space<smem>>
    memref.store %35, %arg7[%c0_11, %c0_12] : memref<1x1xf32, #tpu.memory_space<smem>>
    return
  }
  func.func @transform_0(%arg0: i32) -> i32 {
    %c0_i32 = arith.constant 0 : i32
    %c0_i32_0 = arith.constant 0 : i32
    return %c0_i32 : i32
  }
  func.func @transform_1(%arg0: i32) -> (i32, i32) {
    %c0_i32 = arith.constant 0 : i32
    %c0_i32_0 = arith.constant 0 : i32
    %c0_i32_1 = arith.constant 0 : i32
    return %c0_i32, %c0_i32_0 : i32, i32
  }
  func.func @transform_2(%arg0: i32) -> (i32, i32) {
    %c0_i32 = arith.constant 0 : i32
    %c0_i32_0 = arith.constant 0 : i32
    return %arg0, %c0_i32 : i32, i32
  }
  func.func @transform_3(%arg0: i32) -> (i32, i32) {
    %c0_i32 = arith.constant 0 : i32
    %c0_i32_0 = arith.constant 0 : i32
    return %arg0, %c0_i32 : i32, i32
  }
  func.func @transform_4(%arg0: i32) -> (i32, i32) {
    %c0_i32 = arith.constant 0 : i32
    %c0_i32_0 = arith.constant 0 : i32
    return %arg0, %c0_i32 : i32, i32
  }
  func.func @transform_5(%arg0: i32) -> (i32, i32) {
    %c0_i32 = arith.constant 0 : i32
    %c0_i32_0 = arith.constant 0 : i32
    return %arg0, %c0_i32 : i32, i32
  }
  func.func @transform_6(%arg0: i32) -> (i32, i32) {
    %c0_i32 = arith.constant 0 : i32
    %c0_i32_0 = arith.constant 0 : i32
    return %arg0, %c0_i32 : i32, i32
  }
}

</mosaic_0001>

<llo_original>
// kernel: tpu_custom_call.1
$region0: #{tpu_custom_call.1}
  #allocation0 [shape = 'u32[]', space=smem, size = 0x4, offset = 0x4, fixed_abs, tag = 'smem constant byte address 0x4 - core index']
  #allocation1 [shape = 'u32[144,128]{1,0:T(1,128)}', space=vmem, size = 0x12000, scoped, tag = 'internal scratch']
  %s0 = inlined_call_operand.hbm [shape: f32[3], index: 0, kind: input, shape index: {}]
  %s1 = inlined_call_operand.hbm [shape: f32[1,512], index: 1, kind: input, shape index: {}]
  %s2 = inlined_call_operand.hbm [shape: f32[2,256], index: 2, kind: input, shape index: {}]
  %s3 = inlined_call_operand.hbm [shape: f32[2,256], index: 3, kind: input, shape index: {}]
  %s4 = inlined_call_operand.vmem [shape: f32[2,512], index: 4, kind: input, shape index: {}]
  %s5 = inlined_call_operand.vmem [shape: f32[2,512], index: 5, kind: input, shape index: {}]
  %s6 = inlined_call_operand.hbm [shape: f32[1,1], index: 6, kind: output, shape index: {}]
  %s7 = sld [smem:[#allocation0]]
  $region50: #{tpu_custom_call.1} parent=0
    _
  %s9 = ssub.s32 1, %s7
  %s10 = scalar_select 0, %s9, %s7
  $region1: #{tpu_custom_call.1} parent=0
    #allocation2 [shape = 'u8[512]{0}', space=smem, size = 0x200, scoped, tag = 'input window, operand 0, single buffered']
    #allocation3 [shape = 's32[1]{0}', space=sflag, size = 0x4, scoped, tag = 'scoped memory for tpu_custom_call.1']
    #allocation4 [shape = 's32[1]{0}', space=sflag, size = 0x4, scoped, tag = 'scoped memory for tpu_custom_call.1']
    #allocation5 [shape = 's32[1]{0}', space=sflag, size = 0x4, scoped, tag = 'scoped memory for tpu_custom_call.1']
    #allocation6 [shape = 'u8[2048]{0}', space=vmem, size = 0x800, scoped, tag = 'input window, operand 1, single buffered']
    #allocation7 [shape = 'u8[2048]{0}', space=vmem, size = 0x800, scoped, tag = 'input window, operand 2, single buffered']
    #allocation8 [shape = 's32[1]{0}', space=sflag, size = 0x4, scoped, tag = 'scoped memory for tpu_custom_call.1']
    #allocation9 [shape = 'u8[2048]{0}', space=vmem, size = 0x800, scoped, tag = 'input window, operand 3, single buffered']
    #allocation10 [shape = 'u8[512]{0}', space=smem, size = 0x200, scoped, tag = 'output window, operand 0, single buffered']
    %11 = vsyncpa [#allocation4], 0
    %12 = vsyncpa [#allocation3], 0
    %13 = vsyncpa [#allocation8], 0
    %14 = vsyncpa [#allocation5], 0
    // Predicated region
    $region2: #{tpu_custom_call.1} parent=1 // pred_check
      _
    $region3: #{tpu_custom_call.1} parent=1 // pred_check_branch
      %16 = sbr.rel (0) target = $region5
    $region4: #{tpu_custom_call.1} parent=1 // pred_region
      %s18 = ssub.s32 16, 16
      %19 = vsyncadd [#allocation4], %s18
      %22 = dma.hbm_to_smem %s0, 16, [#allocation2], [#allocation4]
    $region5: #{tpu_custom_call.1} parent=1 // pred_fallthru
      _
    // Predicated region
    $region6: #{tpu_custom_call.1} parent=1 // pred_check
      _
    $region7: #{tpu_custom_call.1} parent=1 // pred_check_branch
      %24 = sbr.rel (0) target = $region9
    $region8: #{tpu_custom_call.1} parent=1 // pred_region
      %s26 = ssub.s32 64, 64
      %27 = vsyncadd [#allocation3], %s26
      %s29 = sshll.u32 [#allocation6], 4
      %s30 = int_to_ptr.vmem [resolvable:$true] %s29
      %32 = dma.hbm_to_vmem [thread:$0]  %s1, 64, %s30, [#allocation3]
    $region9: #{tpu_custom_call.1} parent=1 // pred_fallthru
      _
    // Predicated region
    $region10: #{tpu_custom_call.1} parent=1 // pred_check
      _
    $region11: #{tpu_custom_call.1} parent=1 // pred_check_branch
      %34 = sbr.rel (0) target = $region13
    $region12: #{tpu_custom_call.1} parent=1 // pred_region
      %s36 = ssub.s32 64, 64
      %37 = vsyncadd [#allocation8], %s36
      %s39 = sshll.u32 [#allocation7], 4
      %s40 = int_to_ptr.vmem [resolvable:$true] %s39
      %42 = dma.hbm_to_vmem [thread:$0]  %s2, 64, %s40, [#allocation8]
    $region13: #{tpu_custom_call.1} parent=1 // pred_fallthru
      _
    // Predicated region
    $region14: #{tpu_custom_call.1} parent=1 // pred_check
      _
    $region15: #{tpu_custom_call.1} parent=1 // pred_check_branch
      %44 = sbr.rel (0) target = $region17
    $region16: #{tpu_custom_call.1} parent=1 // pred_region
      %s46 = ssub.s32 64, 64
      %47 = vsyncadd [#allocation8], %s46
      %s49 = sshll.u32 [#allocation9], 4
      %s50 = int_to_ptr.vmem [resolvable:$true] %s49
      %52 = dma.hbm_to_vmem [thread:$0]  %s3, 64, %s50, [#allocation8]
    $region17: #{tpu_custom_call.1} parent=1 // pred_fallthru
      _
    // Predicated region
    $region18: #{tpu_custom_call.1} parent=1 // pred_check
      _
    $region19: #{tpu_custom_call.1} parent=1 // pred_check_branch
      %54 = sbr.rel (0) target = $region21
    $region20: #{tpu_custom_call.1} parent=1 // pred_region
      _
    $region21: #{tpu_custom_call.1} parent=1 // pred_fallthru
      _
    // Predicated region
    $region22: #{tpu_custom_call.1} parent=1 // pred_check
      _
    $region23: #{tpu_custom_call.1} parent=1 // pred_check_branch
      %56 = sbr.rel (0) target = $region25
    $region24: #{tpu_custom_call.1} parent=1 // pred_region
      _
    $region25: #{tpu_custom_call.1} parent=1 // pred_fallthru
      _
    // Predicated region
    $region26: #{tpu_custom_call.1} parent=1 // pred_check
      _
    $region27: #{tpu_custom_call.1} parent=1 // pred_check_branch
      %58 = sbr.rel (0) target = $region29
    $region28: #{tpu_custom_call.1} parent=1 // pred_region
      %59 = dma.done [#allocation4], 16
    $region29: #{tpu_custom_call.1} parent=1 // pred_fallthru
      _
    // Predicated region
    $region30: #{tpu_custom_call.1} parent=1 // pred_check
      _
    $region31: #{tpu_custom_call.1} parent=1 // pred_check_branch
      %61 = sbr.rel (0) target = $region33
    $region32: #{tpu_custom_call.1} parent=1 // pred_region
      %62 = dma.done [#allocation3], 64
    $region33: #{tpu_custom_call.1} parent=1 // pred_fallthru
      _
    // Predicated region
    $region34: #{tpu_custom_call.1} parent=1 // pred_check
      _
    $region35: #{tpu_custom_call.1} parent=1 // pred_check_branch
      %64 = sbr.rel (0) target = $region37
    $region36: #{tpu_custom_call.1} parent=1 // pred_region
      %65 = dma.done [#allocation8], 64
    $region37: #{tpu_custom_call.1} parent=1 // pred_fallthru
      _
    // Predicated region
    $region38: #{tpu_custom_call.1} parent=1 // pred_check
      _
    $region39: #{tpu_custom_call.1} parent=1 // pred_check_branch
      %67 = sbr.rel (0) target = $region41
    $region40: #{tpu_custom_call.1} parent=1 // pred_region
      %68 = dma.done [#allocation8], 64
    $region41: #{tpu_custom_call.1} parent=1 // pred_fallthru
      _
    %69 = sfence
    %s70 = sld [smem:[#allocation2]]
    %s71 = sld [smem:[#allocation2 + $0x1]]
    %s72 = sld [smem:[#allocation2 + $0x2]]
    %v73 = vld [vmem:[#allocation9] sm:$0xf]
    %v74 = vld [vmem:[#allocation7] sm:$0xf]
    %v75 = vsub.f32 %v73, %v74
    %v76 = vmul.f32 %v75, %v75
    %v79 = vunpack.c.l.s4 1983009808
    %v80 = vunpack.c.0.s8 %v79
    %v81 = vlaneseq
    %v82 = vshrl.u32 %v81, 7
    %v83 = vsub.s32 %v80, %v82
    %v84 = vrot.slane %v76, %v83
    %v85 = vcombine.high %v84, %v84
    %vm88 = vcmask 1041408
    %v89 = vsel %vm88, %v84, 0.0
    %v90 = vsel %vm88, %v85, 0.0
    %v91 = vadd.f32 %v89, %v90
    %92 = vadd.xlane.f32.xlu0 %v91
    %v93 = vpop.xlane.xlu0 %92
    %v94 = vrot.slane %v93, 4
    %v95 = vadd.f32 %v93, %v94
    %v96 = vrot.slane %v95, 2
    %v97 = vadd.f32 %v95, %v96
    %v98 = vrot.slane %v97, 1
    %v99 = vadd.f32 %v97, %v98
    %s100 = vtos %v99
    %v101 = vld [vmem:[%s4] sm:$0xff]
    %v102 = vld [vmem:[%s5] sm:$0xff]
    %v103 = vsub.f32 %v102, %v101
    %v105 = vcombine.high %v102, %v102
    %v107 = vunpack.c.l.s4 1983009808
    %v108 = vunpack.c.0.s8 %v107
    %v109 = vlaneseq
    %v110 = vshrl.u32 %v109, 7
    %v111 = vsub.s32 %v108, %v110
    %v112 = vrot.slane %v102, %v111
    %v114 = vunpack.c.l.s4 1983009808
    %v115 = vunpack.c.0.s8 %v114
    %v116 = vlaneseq
    %v117 = vshrl.u32 %v116, 7
    %v118 = vsub.s32 %v115, %v117
    %v119 = vrot.slane %v105, %v118
    %v120 = vcombine.high %v112, %v112
    %v121 = vcombine.high %v119, %v119
    %126 = vrot.lane.b32.xlu0 %v112, 126
    %v127 = vpop.permute.xlu0 %126
    %128 = vrot.lane.b32.xlu0 %v120, 126
    %v129 = vpop.permute.xlu0 %128
    %130 = vrot.lane.b32.xlu0 %v119, 126
    %v131 = vpop.permute.xlu0 %130
    %132 = vrot.lane.b32.xlu0 %v121, 126
    %v133 = vpop.permute.xlu0 %132
    %v134 = vlaneseq
    %v135 = vand.u32 %v134, 127
    %vm136 = vcmp.lt.s32.totalorder %v135, 126
    %v137 = vsel %vm136, %v131, %v133
    %v138 = vsel %vm136, %v129, %v131
    %v139 = vsel %vm136, %v127, %v129
    %v140 = vsel %vm136, %v133, %v127
    %141 = vrot.lane.b32.xlu0 %v112, 127
    %v142 = vpop.permute.xlu0 %141
    %143 = vrot.lane.b32.xlu0 %v120, 127
    %v144 = vpop.permute.xlu0 %143
    %145 = vrot.lane.b32.xlu0 %v119, 127
    %v146 = vpop.permute.xlu0 %145
    %147 = vrot.lane.b32.xlu0 %v121, 127
    %v148 = vpop.permute.xlu0 %147
    %vm149 = vcmp.lt.s32.totalorder %v135, 127
    %v150 = vsel %vm149, %v146, %v148
    %v151 = vsel %vm149, %v144, %v146
    %v152 = vsel %vm149, %v142, %v144
    %v153 = vsel %vm149, %v148, %v142
    %154 = vrot.lane.b32.xlu0 %v112, 95
    %v155 = vpop.permute.xlu0 %154
    %156 = vrot.lane.b32.xlu0 %v120, 95
    %v157 = vpop.permute.xlu0 %156
    %158 = vrot.lane.b32.xlu0 %v119, 95
    %v159 = vpop.permute.xlu0 %158
    %160 = vrot.lane.b32.xlu0 %v121, 95
    %v161 = vpop.permute.xlu0 %160
    %vm162 = vcmp.lt.s32.totalorder %v135, 95
    %v163 = vsel %vm162, %v159, %v161
    %v164 = vsel %vm162, %v157, %v159
    %v165 = vsel %vm162, %v155, %v157
    %v166 = vsel %vm162, %v161, %v155
    %v167 = vld [vmem:[#allocation6] sm:$0xf]
    %v168 = vsub.f32 %v139, %v112
    %v169 = vsub.f32 %v138, %v120
    %v170 = vsub.f32 %v137, %v119
    %v171 = vsub.f32 %v140, %v121
    %v172 = vsub.f32 %v165, %v152
    %v173 = vsub.f32 %v164, %v151
    %v174 = vsub.f32 %v163, %v150
    %v175 = vsub.f32 %v166, %v153
    %v176 = vadd.f32 %v168, %v172
    %v177 = vadd.f32 %v169, %v173
    %v178 = vadd.f32 %v170, %v174
    %v179 = vadd.f32 %v171, %v175
    %v181 = vlaneseq
    %v182 = vshrl.u32 %v181, 7
    %v183 = vsub.s32 0, %v182
    %v184 = vrot.slane %v167, %v183
    %v185 = vlaneseq
    %v186 = vshrl.u32 %v185, 7
    %v187 = vsub.s32 1, %v186
    %v188 = vrot.slane %v167, %v187
    %v189 = vlaneseq
    %v190 = vshrl.u32 %v189, 7
    %v191 = vsub.s32 2, %v190
    %v192 = vrot.slane %v167, %v191
    %v193 = vlaneseq
    %v194 = vshrl.u32 %v193, 7
    %v195 = vsub.s32 3, %v194
    %v196 = vrot.slane %v167, %v195
    %v201 = vmul.f32 %v184, %v176
    %v202 = vmul.f32 %v188, %v177
    %v203 = vmul.f32 %v192, %v178
    %v204 = vmul.f32 %v196, %v179
    %v205 = vmul.f32 %v103, %v103
    %v206 = vstv %s71
    %v207 = vmul.f32 %v206, %v205
    %v208 = vmul.f32 %v201, %v201
    %v209 = vmul.f32 %v202, %v202
    %v210 = vmul.f32 %v203, %v203
    %v211 = vmul.f32 %v204, %v204
    %v212 = vstv %s72
    %v213 = vmul.f32 %v212, %v208
    %v214 = vmul.f32 %v212, %v209
    %v215 = vmul.f32 %v212, %v210
    %v216 = vmul.f32 %v212, %v211
    %v221 = vcombine.low %v213, %v214
    %v222 = vcombine.low %v215, %v216
    %v224 = vunpack.c.l.s4 1983009808
    %v225 = vunpack.c.0.s8 %v224
    %v226 = vlaneseq
    %v227 = vshrl.u32 %v226, 7
    %v228 = vsub.s32 %v225, %v227
    %v229 = vrot.slane %v221, %v228
    %v231 = vunpack.c.l.s4 1983009808
    %v232 = vunpack.c.0.s8 %v231
    %v233 = vlaneseq
    %v234 = vshrl.u32 %v233, 7
    %v235 = vsub.s32 %v232, %v234
    %v236 = vrot.slane %v222, %v235
    %v237 = vcombine.low %v229, %v236
    %v239 = vadd.f32 %v207, %v237
    %s240 = smul.f32 %s70, %s100
    %v242 = vcombine.high %v239, %v239
    %v244 = vunpack.c.l.s4 1983009808
    %v245 = vunpack.c.0.s8 %v244
    %v246 = vlaneseq
    %v247 = vshrl.u32 %v246, 7
    %v248 = vsub.s32 %v245, %v247
    %v249 = vrot.slane %v239, %v248
    %v251 = vunpack.c.l.s4 1983009808
    %v252 = vunpack.c.0.s8 %v251
    %v253 = vlaneseq
    %v254 = vshrl.u32 %v253, 7
    %v255 = vsub.s32 %v252, %v254
    %v256 = vrot.slane %v242, %v255
    %v257 = vcombine.high %v249, %v249
    %v258 = vcombine.high %v256, %v256
    %v263 = vsel %vm88, %v249, 0.0
    %v264 = vsel %vm88, %v257, 0.0
    %v265 = vadd.f32 %v263, %v264
    %v266 = vsel %vm88, %v256, 0.0
    %v267 = vadd.f32 %v265, %v266
    %v268 = vsel %vm88, %v258, 0.0
    %v269 = vadd.f32 %v267, %v268
    %270 = vadd.xlane.f32.xlu0 %v269
    %v271 = vpop.xlane.xlu0 %270
    %v272 = vrot.slane %v271, 4
    %v273 = vadd.f32 %v271, %v272
    %v274 = vrot.slane %v273, 2
    %v275 = vadd.f32 %v273, %v274
    %v276 = vrot.slane %v275, 1
    %v277 = vadd.f32 %v275, %v276
    %s278 = vtos %v277
    %s279 = sadd.f32 %s240, %s278
    %s280 = scalar_lea.smem [#allocation10], 0
    %281 = sst [smem:[%s280]] %s279
    // Predicated region
    $region42: #{tpu_custom_call.1} parent=1 // pred_check
      _
    $region43: #{tpu_custom_call.1} parent=1 // pred_check_branch
      %283 = sbr.rel (0) target = $region45
    $region44: #{tpu_custom_call.1} parent=1 // pred_region
      %s285 = ssub.s32 16, 16
      %286 = vsyncadd [#allocation5], %s285
      %289 = dma.smem_to_hbm [#allocation10], 16, %s6, [#allocation5]
    $region45: #{tpu_custom_call.1} parent=1 // pred_fallthru
      _
    // Predicated region
    $region46: #{tpu_custom_call.1} parent=1 // pred_check
      _
    $region47: #{tpu_custom_call.1} parent=1 // pred_check_branch
      %291 = sbr.rel (0) target = $region49
    $region48: #{tpu_custom_call.1} parent=1 // pred_region
      %292 = dma.done [#allocation5], 16
    $region49: #{tpu_custom_call.1} parent=1 // pred_fallthru
      _
    %293 = sfence
    %294 = vsyncpa [#allocation3], 1
    %295 = vsyncpa [#allocation8], 1
    %296 = vsyncpa [#allocation4], 1
    %297 = vsyncpa [#allocation5], 1

</llo_original>
